<compile_context>
chip_gen: v7x
topology: tpu7x:2x2x1
jax: 0.10.0
libtpu: 0.0.40
codegen_flags: <defaults>
</compile_context>

<pallas_src>
import functools
import math

import jax
import jax.numpy as jnp
from jax.experimental import pallas as pl
from jax.experimental.pallas import tpu as pltpu


# --------------------------- conv 1x1 + ReLU kernel -------------------------

def _conv1x1_relu_kernel(w_ref, b_ref, x_ref, o_ref, *, cout, cin):
    # w_ref: (Cout, Cin) scalars in SMEM; b_ref: (Cout,) scalars in SMEM
    # x_ref: (1, Cin, T) VMEM block; o_ref: (1, Cout, T) VMEM block
    x = x_ref[0].astype(jnp.float32)                      # (Cin, T)
    xs = [x[ci:ci + 1, :] for ci in range(cin)]           # hoisted channel rows
    rows = []
    for co in range(cout):
        acc = b_ref[co] + w_ref[co, 0] * xs[0]            # VPU scalar*vector FMA
        for ci in range(1, cin):
            acc = acc + w_ref[co, ci] * xs[ci]
        rows.append(acc)                                  # (1, T)
    y = jnp.concatenate(rows, axis=0)                     # (Cout, T), sublane=8
    o_ref[0] = jnp.maximum(y, 0.0).astype(o_ref.dtype)    # lane-dense full store


def _conv_geometry(hw):
    # Lane-align HW, then pick the largest tile (<= 2048 lanes) and pad HW up
    # to a multiple of it: fewest grid steps, every block full-sized, and a
    # (Cout, tile) block is well under VMEM even with double-buffering.
    hwp = ((hw + 127) // 128) * 128
    tile = min(hwp, 2048)
    hwp = ((hwp + tile - 1) // tile) * tile
    return hwp, tile


def conv1x1_relu(x_nchw, weight, bias):
    """Inner model forward: 1x1 conv + bias + ReLU, computed in NCHW.

    weight: (Cout, Cin, 1, 1) torch layout, bias: (Cout,).
    """
    N, Cin, H, W = x_nchw.shape
    Cout = weight.shape[0]
    HW = H * W
    x3 = x_nchw.reshape(N, Cin, HW)

    HWp, tile = _conv_geometry(HW)
    if HWp != HW:
        x3 = jnp.pad(x3, ((0, 0), (0, 0), (0, HWp - HW)))

    w2d = weight.reshape(Cout, Cin).astype(jnp.float32)
    b1d = bias.astype(jnp.float32)

    out3 = pl.pallas_call(
        functools.partial(_conv1x1_relu_kernel, cout=Cout, cin=Cin),
        out_shape=jax.ShapeDtypeStruct((N, Cout, HWp), x_nchw.dtype),
        grid=(N, HWp // tile),
        in_specs=[
            pl.BlockSpec(memory_space=pltpu.MemorySpace.SMEM),      # weight
            pl.BlockSpec(memory_space=pltpu.MemorySpace.SMEM),      # bias
            pl.BlockSpec((1, Cin, tile), lambda n, t: (n, 0, t)),   # activations
        ],
        out_specs=pl.BlockSpec((1, Cout, tile), lambda n, t: (n, 0, t)),
        compiler_params=pltpu.CompilerParams(
            dimension_semantics=("parallel", "parallel")),
    )(w2d, b1d, x3)

    if HWp != HW:
        out3 = out3[:, :, :HW]
    return out3.reshape(N, Cout, H, W)


# ------------------------------ EMA update kernel ---------------------------

def _ema_update_kernel(e_ref, m_ref, o_ref, *, decay):
    # elementwise: decay * ema + (1 - decay) * model, tiled & pipelined
    o_ref[...] = decay * e_ref[...] + (1.0 - decay) * m_ref[...]


def _slab_geometry(total):
    # Wide lane-dense last dim; row tile sized so one buffer is <= 2 MiB
    # (3 operands x 2 pipeline buffers stays far under v7x's VMEM budget).
    wide = 1024 if total >= 8 * 1024 else 128
    rows = max(1, -(-total // wide))
    rows = ((rows + 7) // 8) * 8
    tile_r = min(rows, 512)
    rows = ((rows + tile_r - 1) // tile_r) * tile_r
    return wide, rows, tile_r


def _pack_leaves(leaves, total, rows, wide):
    flat = jnp.concatenate([jnp.ravel(l).astype(jnp.float32) for l in leaves])
    pad = rows * wide - total
    if pad:
        flat = jnp.pad(flat, (0, pad))
    return flat.reshape(rows, wide)


def _unpack_slab(slab, treedef, shapes, dtypes, sizes, total):
    flat = slab.reshape(-1)[:total]
    leaves, off = [], 0
    for shp, dt, sz in zip(shapes, dtypes, sizes):
        leaves.append(flat[off:off + sz].reshape(shp).astype(dt))
        off += sz
    return jax.tree_util.tree_unflatten(treedef, leaves)


def _make_ema_pallas_call(decay, rows, wide, tile_r):
    return pl.pallas_call(
        functools.partial(_ema_update_kernel, decay=decay),
        out_shape=jax.ShapeDtypeStruct((rows, wide), jnp.float32),
        grid=(rows // tile_r,),
        in_specs=[
            pl.BlockSpec((tile_r, wide), lambda i: (i, 0)),
            pl.BlockSpec((tile_r, wide), lambda i: (i, 0)),
        ],
        out_specs=pl.BlockSpec((tile_r, wide), lambda i: (i, 0)),
        input_output_aliases={0: 0},              # in-place EMA slab update
        compiler_params=pltpu.CompilerParams(
            dimension_semantics=("parallel",)),
    )


# ----------------------------- EMA wrapper logic ----------------------------

class ModelEMA:
    def __init__(self, model_state, decay=None, half_life=None):
        assert (decay is None) ^ (half_life is None), \
            "either decay or half_life must be None"
        if half_life is not None:
            decay = math.exp(-math.log(2) / half_life)
        if decay <= 0.0 or decay >= 1.0:
            raise ValueError("Decay must be between 0 and 1")
        self.decay = decay
        self.half_life = half_life

        leaves, treedef = jax.tree_util.tree_flatten(model_state)
        self._treedef = treedef
        self._shapes = [l.shape for l in leaves]
        self._dtypes = [l.dtype for l in leaves]
        self._sizes = [l.size for l in leaves]
        self._total = sum(self._sizes)

        self._wide, self._rows, self._tile_r = _slab_geometry(self._total)

        # f32 master copy of the EMA state (copy.deepcopy equivalent), stored
        # permanently as one lane-dense slab.  Keeping it f32 avoids the
        # bf16 EMA-stall issue when (1-decay)*delta is below bf16 precision.
        self._slab = _pack_leaves(leaves, self._total, self._rows, self._wide)
        self._materialized = None

        ema_call = _make_ema_pallas_call(
            self.decay, self._rows, self._wide, self._tile_r)
        total, rows, wide = self._total, self._rows, self._wide

        def _update_impl(ema_slab, model_state):
            m_leaves = jax.tree_util.tree_leaves(model_state)
            m_slab = _pack_leaves(m_leaves, total, rows, wide)
            return ema_call(ema_slab, m_slab)

        # jit the whole update path; donate the old slab so the aliased output
        # really reuses its HBM buffer.
        self._update_fn = jax.jit(_update_impl, donate_argnums=(0,))

    def update(self, model_state):
        _, treedef = jax.tree_util.tree_flatten(model_state)
        assert treedef == self._treedef, "model/EMA pytree structure mismatch"
        self._slab = self._update_fn(self._slab, model_state)
        self._materialized = None

    def set(self, model_state):
        leaves, treedef = jax.tree_util.tree_flatten(model_state)
        assert treedef == self._treedef, "model/EMA pytree structure mismatch"
        self._slab = _pack_leaves(leaves, self._total, self._rows, self._wide)
        self._materialized = None

    def state_dict(self):
        if self._materialized is None:
            self._materialized = _unpack_slab(
                self._slab, self._treedef, self._shapes, self._dtypes,
                self._sizes, self._total)
        return self._materialized

    def __call__(self, x):
        st = self.state_dict()
        return conv1x1_relu(x, st["weight"], st["bias"])


class EMAWrapper:
    def __init__(self, model_state, decay=0.9999, half_life=None, delay=0,
                 update_on_forward=False):
        self.model_state = model_state
        self.update_on_forward = update_on_forward
        self.ema = ModelEMA(model_state, decay=decay, half_life=half_life)
        self.delay = delay
        self._step = 0          # register_buffer('_step', torch.zeros(()))
        self.training = True

    def train(self):
        self.training = True
        return self

    def eval(self):
        self.training = False
        return self

    def update(self):
        if not self.training:
            raise RuntimeError("update should only be called in training mode")
        # NOTE: matches the PyTorch original exactly -- the step counter is
        # only advanced once the delay gate is passed.
        if self._step < self.delay:
            return
        self.ema.update(self.model_state)
        self._step += 1

    def forward(self, x):
        if self.training:
            if self.update_on_forward:
                self.update()
            return conv1x1_relu(x, self.model_state["weight"],
                                self.model_state["bias"])
        else:
            return self.ema(x)

    __call__ = forward


# ---------------------------------- main ------------------------------------

if __name__ == "__main__":
    key = jax.random.PRNGKey(0)
    k_x, k_w, k_b = jax.random.split(key, 3)

    N, Cin, Cout, H, W = 2, 4, 8, 16, 16
    x = jax.random.normal(k_x, (N, Cin, H, W), dtype=jnp.float32)

    # deterministic inner-model parameters (Conv2d(4, 8, kernel_size=1))
    model_state = {
        "weight": jax.random.normal(k_w, (Cout, Cin, 1, 1), jnp.float32) * 0.1,
        "bias": jax.random.normal(k_b, (Cout,), jnp.float32) * 0.1,
    }

    wrapper = EMAWrapper(model_state, decay=0.9999, delay=0,
                         update_on_forward=True)

    # training-mode forward: updates EMA (Pallas elementwise kernel, in-place
    # slab) then runs the inner model (Pallas NCHW conv kernel)
    wrapper.train()
    y_train = wrapper(x)
    jax.block_until_ready(y_train)

    # eval-mode forward: runs the EMA copy of the model
    wrapper.eval()
    y_eval = wrapper(x)
    jax.block_until_ready(y_eval)

    # reference checks (plain JAX)
    w2d = model_state["weight"].reshape(Cout, Cin)
    ref = jnp.maximum(
        jnp.einsum("nchw,oc->nohw", x, w2d)
        + model_state["bias"].reshape(1, Cout, 1, 1), 0.0)
    assert jnp.allclose(y_train, ref, atol=1e-5, rtol=1e-5)
    # EMA started as an exact copy, so after one update it equals the model
    assert jnp.allclose(y_eval, ref, atol=1e-5, rtol=1e-5)
    assert wrapper._step == 1

    # EMA math check: perturb the model, update, compare against reference.
    new_state = {
        "weight": model_state["weight"] + 1.0,
        "bias": model_state["bias"] - 0.5,
    }
    wrapper.model_state = new_state
    wrapper.train()
    wrapper.update()
    d = wrapper.ema.decay
    ema_sd = wrapper.ema.state_dict()
    ref_w = d * model_state["weight"] + (1.0 - d) * new_state["weight"]
    ref_b = d * model_state["bias"] + (1.0 - d) * new_state["bias"]
    assert jnp.allclose(ema_sd["weight"], ref_w, atol=1e-6, rtol=1e-5)
    assert jnp.allclose(ema_sd["bias"], ref_b, atol=1e-6, rtol=1e-5)
    assert wrapper._step == 2

    print("KERNEL_OK")
</pallas_src>

<mosaic_0001>
module attributes {stable_mosaic.version = 11 : i64} {
  func.func @_ema_update_kernel(%arg0: i32, %arg1: memref<8x128xf32, #tpu.memory_space<vmem>>, %arg2: memref<8x128xf32, #tpu.memory_space<vmem>>, %arg3: memref<8x128xf32, #tpu.memory_space<vmem>>) attributes {dimension_semantics = [#tpu.dimension_semantics<parallel>], iteration_bounds = array<i64: 1>, scalar_prefetch = 0 : i64, scratch_operands = 0 : i64, tpu.core_type = #tpu.core_type<tc>, window_params = [{transform_indices = @transform_0, window_bounds = array<i64: 8, 128>}, {transform_indices = @transform_1, window_bounds = array<i64: 8, 128>}, {transform_indices = @transform_2, window_bounds = array<i64: 8, 128>}]} {
    %c0 = arith.constant 0 : index
    %c0_0 = arith.constant 0 : index
    %0 = vector.load %arg1[%c0, %c0_0] : memref<8x128xf32, #tpu.memory_space<vmem>>, vector<8x128xf32>
    %cst = arith.constant 0.999899983 : f32
    %1 = vector.broadcast %cst : f32 to vector<8x128xf32>
    %2 = arith.mulf %1, %0 : vector<8x128xf32>
    %c0_1 = arith.constant 0 : index
    %c0_2 = arith.constant 0 : index
    %3 = vector.load %arg2[%c0_1, %c0_2] : memref<8x128xf32, #tpu.memory_space<vmem>>, vector<8x128xf32>
    %cst_3 = arith.constant 9.99999974E-5 : f32
    %4 = vector.broadcast %cst_3 : f32 to vector<8x128xf32>
    %5 = arith.mulf %4, %3 : vector<8x128xf32>
    %6 = arith.addf %2, %5 : vector<8x128xf32>
    %c0_4 = arith.constant 0 : index
    %c0_5 = arith.constant 0 : index
    %7 = vector.load %arg3[%c0_4, %c0_5] : memref<8x128xf32, #tpu.memory_space<vmem>>, vector<8x128xf32>
    tpu.vector_store %arg3[%c0_4, %c0_5], %6 {strides = array<i32>} : memref<8x128xf32, #tpu.memory_space<vmem>>, vector<8x128xf32>,
    return
  }
  func.func @transform_0(%arg0: i32) -> (i32, i32) {
    %c0_i32 = arith.constant 0 : i32
    %c0_i32_0 = arith.constant 0 : i32
    return %arg0, %c0_i32 : i32, i32
  }
  func.func @transform_1(%arg0: i32) -> (i32, i32) {
    %c0_i32 = arith.constant 0 : i32
    %c0_i32_0 = arith.constant 0 : i32
    return %arg0, %c0_i32 : i32, i32
  }
  func.func @transform_2(%arg0: i32) -> (i32, i32) {
    %c0_i32 = arith.constant 0 : i32
    %c0_i32_0 = arith.constant 0 : i32
    return %arg0, %c0_i32 : i32, i32
  }
}

</mosaic_0001>

<llo_original>
// kernel: _update_impl.1
$region0: #{_update_impl.1}
  #allocation0 [shape = 'u32[]', space=smem, size = 0x4, offset = 0x4, fixed_abs, tag = 'smem constant byte address 0x4 - core index']
  #allocation1 [shape = 'u32[144,128]{1,0:T(1,128)}', space=vmem, size = 0x12000, scoped, tag = 'internal scratch']
  %s0 = inlined_call_operand.hbm [shape: f32[8,128], index: 0, kind: input, shape index: {}, may-alias: {0,2}]
  %s1 = inlined_call_operand.vmem [shape: f32[8,128], index: 1, kind: input, shape index: {}]
  %s2 = inlined_call_operand.hbm [shape: f32[8,128], index: 2, kind: output, shape index: {}, may-alias: {0,2}]
  %s3 = sld [smem:[#allocation0]]
  $region22: #{_update_impl.1} parent=0
    _
  %s5 = ssub.s32 1, %s3
  %s6 = scalar_select 0, %s5, %s3
  $region1: #{_update_impl.1} parent=0
    #allocation2 [shape = 'u8[4096]{0}', space=vmem, size = 0x1000, scoped, tag = 'input window, operand 0, single buffered']
    #allocation3 [shape = 's32[1]{0}', space=sflag, size = 0x4, scoped, tag = 'scoped memory for _update_impl.1']
    #allocation4 [shape = 's32[1]{0}', space=sflag, size = 0x4, scoped, tag = 'scoped memory for _update_impl.1']
    #allocation5 [shape = 'u8[4096]{0}', space=vmem, size = 0x1000, scoped, tag = 'output window, operand 0, single buffered']
    %7 = vsyncpa [#allocation3], 0
    %8 = vsyncpa [#allocation4], 0
    // Predicated region
    $region2: #{_update_impl.1} parent=1 // pred_check
      _
    $region3: #{_update_impl.1} parent=1 // pred_check_branch
      %10 = sbr.rel (0) target = $region5
    $region4: #{_update_impl.1} parent=1 // pred_region
      %s12 = ssub.s32 128, 128
      %13 = vsyncadd [#allocation3], %s12
      %s15 = sshll.u32 [#allocation2], 4
      %s16 = int_to_ptr.vmem [resolvable:$true] %s15
      %18 = dma.hbm_to_vmem [thread:$0]  %s0, 128, %s16, [#allocation3]
    $region5: #{_update_impl.1} parent=1 // pred_fallthru
      _
    // Predicated region
    $region6: #{_update_impl.1} parent=1 // pred_check
      _
    $region7: #{_update_impl.1} parent=1 // pred_check_branch
      %20 = sbr.rel (0) target = $region9
    $region8: #{_update_impl.1} parent=1 // pred_region
      _
    $region9: #{_update_impl.1} parent=1 // pred_fallthru
      _
    // Predicated region
    $region10: #{_update_impl.1} parent=1 // pred_check
      _
    $region11: #{_update_impl.1} parent=1 // pred_check_branch
      %22 = sbr.rel (0) target = $region13
    $region12: #{_update_impl.1} parent=1 // pred_region
      %23 = dma.done [#allocation3], 128
    $region13: #{_update_impl.1} parent=1 // pred_fallthru
      _
    %v24 = vld [vmem:[#allocation2] sm:$0xff]
    %v25 = vmul.f32 %v24, 0.9999
    %v26 = vld [vmem:[%s1] sm:$0xff]
    %v27 = vmul.f32 %v26, 0.0001
    %v28 = vadd.f32 %v25, %v27
    %29 = vst [vmem:[#allocation5] sm:$0xff] %v28
    // Predicated region
    $region14: #{_update_impl.1} parent=1 // pred_check
      _
    $region15: #{_update_impl.1} parent=1 // pred_check_branch
      %31 = sbr.rel (0) target = $region17
    $region16: #{_update_impl.1} parent=1 // pred_region
      %s33 = ssub.s32 128, 128
      %34 = vsyncadd [#allocation4], %s33
      %s36 = sshll.u32 [#allocation5], 4
      %s37 = int_to_ptr.vmem [resolvable:$true] %s36
      %39 = dma.vmem_to_hbm [thread:$0]  %s37, 128, %s2, [#allocation4]
    $region17: #{_update_impl.1} parent=1 // pred_fallthru
      _
    // Predicated region
    $region18: #{_update_impl.1} parent=1 // pred_check
      _
    $region19: #{_update_impl.1} parent=1 // pred_check_branch
      %41 = sbr.rel (0) target = $region21
    $region20: #{_update_impl.1} parent=1 // pred_region
      %42 = dma.done [#allocation4], 128
    $region21: #{_update_impl.1} parent=1 // pred_fallthru
      _
    %43 = vsyncpa [#allocation3], 1
    %44 = vsyncpa [#allocation4], 1

</llo_original>
